<compile_context>
chip_gen: v6e
topology: v6e:2x2x1
jax: 0.10.0
libtpu: 0.0.40
codegen_flags: <defaults>
</compile_context>

<pallas_src>
import jax
import jax.numpy as jnp
from jax.experimental import pallas as pl
from jax.experimental.pallas import tpu as pltpu


def _round_up(v, m):
    return (v + m - 1) // m * m


def _vmem_capacity_bytes():
    """Physical per-core VMEM; falls back to the v7x (smallest) value."""
    try:
        return int(pltpu.get_tpu_info().vmem_capacity_bytes)
    except Exception:
        return 64 * 1024 * 1024


# ---------------------------------------------------------------------------
# Kernel bodies.  Blocks are (nb, C, T): channels in sublanes, pixels in lanes.
# ---------------------------------------------------------------------------

def _fusion_kernel_stacked(x1_ref, x2_ref, watt_ref, batt_ref, wo_ref, bo_ref,
                           o_ref, xs_ref):
    """Tiny-C path: x1/x2 stacked along sublanes, block-diag attention weight."""
    C = x1_ref.shape[1]
    # xs = [x1; x2] : (nb, 2C, T) in f32 (sigmoid / gating stay in f32).
    xs_ref[:, :C, :] = x1_ref[...].astype(xs_ref.dtype)
    xs_ref[:, C:, :] = x2_ref[...].astype(xs_ref.dtype)
    watt = watt_ref[...]        # (2C, 2C) block-diag [w1 0; 0 w2]
    batt = batt_ref[...]        # (2C, 1)
    wo = wo_ref[...]            # (C, 2C)
    bo = bo_ref[...]            # (C, 1)
    for i in range(x1_ref.shape[0]):            # static unroll over images
        x = xs_ref[i]                           # (2C, T) f32
        att = jax.nn.sigmoid(
            jnp.dot(watt, x.astype(watt.dtype),
                    preferred_element_type=jnp.float32) + batt)
        feat = x * att                          # gated features, f32
        out = jnp.dot(wo, feat.astype(wo.dtype),
                      preferred_element_type=jnp.float32) + bo
        o_ref[i] = out.astype(o_ref.dtype)


def _fusion_kernel_split(x1_ref, x2_ref, w1_ref, b1_ref, w2_ref, b2_ref,
                         wo_ref, bo_ref, o_ref, fcat_ref):
    """General path: two attention matmuls + ONE fused (C, 2C) output matmul."""
    C = x1_ref.shape[1]
    w1 = w1_ref[...]
    b1 = b1_ref[...]
    w2 = w2_ref[...]
    b2 = b2_ref[...]
    wo = wo_ref[...]
    bo = bo_ref[...]
    for i in range(x1_ref.shape[0]):            # static unroll over images
        a = x1_ref[i]                           # (C, T)
        b = x2_ref[i]
        att1 = jax.nn.sigmoid(
            jnp.dot(w1, a.astype(w1.dtype),
                    preferred_element_type=jnp.float32) + b1)
        att2 = jax.nn.sigmoid(
            jnp.dot(w2, b.astype(w2.dtype),
                    preferred_element_type=jnp.float32) + b2)
        # fcat = [feat1; feat2] : contracted in a single MXU pass below.
        fcat_ref[i, :C, :] = (a.astype(jnp.float32) * att1).astype(fcat_ref.dtype)
        fcat_ref[i, C:, :] = (b.astype(jnp.float32) * att2).astype(fcat_ref.dtype)
        out = jnp.dot(wo, fcat_ref[i], preferred_element_type=jnp.float32) + bo
        o_ref[i] = out.astype(o_ref.dtype)


# ---------------------------------------------------------------------------
# Wrapper
# ---------------------------------------------------------------------------

def attention_fusion_pallas(x1, x2, params, *, tile_hw=None, batch_block=None,
                            out_dtype=None):
    """x1, x2: NCHW.  params: w1, w2 (C, C); wo (C, 2C); b1, b2, bo (C, 1)."""
    N, C, H, W = x1.shape
    assert x2.shape == x1.shape
    HW = H * W
    itemsize = jnp.dtype(x1.dtype).itemsize
    out_dtype = x1.dtype if out_dtype is None else jnp.dtype(out_dtype)

    vmem_cap = _vmem_capacity_bytes()
    big_vmem = vmem_cap >= 96 * 1024 * 1024               # v5e / v6e: 128 MiB
    max_block_bytes = (6 << 20) if big_vmem else (3 << 20)  # v7x: 64 MiB VMEM

    # bf16 matmul operands once the MXU (not HBM) becomes the binding unit.
    mm_dtype = jnp.bfloat16 if C >= 256 else jnp.float32
    # Tiny channel counts waste sublanes -> stacked block-diagonal path.
    stacked = C < (32 // itemsize)

    # ---- pixel tile (lanes) & batch block (images per grid step) ----
    if tile_hw is None:
        cols = (max_block_bytes // max(1, C * itemsize)) // 128 * 128
        tile_hw = int(min(HW, max(128, cols)))
    nb = 1
    if batch_block is not None:
        nb = max(1, min(int(batch_block), N))
    elif tile_hw >= HW and N > 1:
        # Whole image fits in one lane tile: amortize the ~0.35us/step overhead
        # by blocking several images per grid step (keep blocks full: nb | N).
        tile_hw = HW
        cap = max(1, max_block_bytes // max(1, C * HW * itemsize))
        cap = min(cap, 8, N)
        nb = max(d for d in range(1, cap + 1) if N % d == 0)

    # v7x shards the parallel grid axes over 2 TensorCores -> make sure there
    # are at least 2 grid steps whenever the problem allows it.
    if pl.cdiv(N, nb) * pl.cdiv(HW, tile_hw) < 2:
        if HW > 128:
            tile_hw = min(tile_hw, _round_up(pl.cdiv(HW, 2), 128))
        elif nb > 1:
            nb = max(d for d in range(1, nb) if N % d == 0)

    grid = (pl.cdiv(N, nb), pl.cdiv(HW, tile_hw))

    # Free reshapes: channels -> sublanes, pixels -> lanes (NCHW native).
    r1 = x1.reshape(N, C, HW)
    r2 = x2.reshape(N, C, HW)

    # ---- weights (block index never changes -> VMEM-resident, never re-DMA'd)
    if stacked:
        watt = jnp.zeros((2 * C, 2 * C), jnp.float32)
        watt = watt.at[:C, :C].set(params["w1"]).at[C:, C:].set(params["w2"])
        batt = jnp.concatenate([params["b1"], params["b2"]], axis=0)
        weights = [watt.astype(mm_dtype), batt.astype(jnp.float32),
                   params["wo"].astype(mm_dtype), params["bo"].astype(jnp.float32)]
        kernel = _fusion_kernel_stacked
    else:
        weights = [params["w1"].astype(mm_dtype), params["b1"].astype(jnp.float32),
                   params["w2"].astype(mm_dtype), params["b2"].astype(jnp.float32),
                   params["wo"].astype(mm_dtype), params["bo"].astype(jnp.float32)]
        kernel = _fusion_kernel_split

    w_bytes = sum(int(w.size) * jnp.dtype(w.dtype).itemsize for w in weights)
    # Once the weights are big, drop them to a single VMEM buffer (their block
    # index is constant, so double-buffering them only wastes VMEM on v7x).
    single_buffer_w = w_bytes > (2 << 20)

    def _const_spec(shape):
        idx = lambda n, t: (0,) * len(shape)
        if single_buffer_w:
            return pl.BlockSpec(shape, idx, pipeline_mode=pl.Buffered(1))
        return pl.BlockSpec(shape, idx)

    pix_spec = pl.BlockSpec((nb, C, tile_hw), lambda n, t: (n, 0, t))
    in_specs = [pix_spec, pix_spec] + [_const_spec(w.shape) for w in weights]

    # VMEM scratch holding the stacked / concatenated (2C, T) matmul operand.
    scratch_dtype = jnp.float32 if stacked else mm_dtype
    scratch = pltpu.VMEM((nb, 2 * C, tile_hw), scratch_dtype)

    # ---- VMEM budget ----
    blk = nb * C * tile_hw
    io_bytes = 2 * (2 * blk * itemsize + blk * out_dtype.itemsize)  # dbl-buffered
    sc_bytes = 2 * blk * jnp.dtype(scratch_dtype).itemsize
    need = io_bytes + (1 if single_buffer_w else 2) * w_bytes + sc_bytes + (4 << 20)
    # TODO(synk): for very large C (>= 1024) tile the output channels of wo and
    # the attention weights instead of keeping them all VMEM-resident.
    vmem_limit = int(min(max(need, 16 << 20), int(0.75 * vmem_cap)))

    flops = (16 if stacked else 8) * C * C * N * HW + 2 * C * N * HW
    bytes_accessed = (2 * itemsize + out_dtype.itemsize) * N * C * HW + w_bytes

    out_rows = pl.pallas_call(
        kernel,
        out_shape=jax.ShapeDtypeStruct((N, C, HW), out_dtype),
        grid_spec=pltpu.PrefetchScalarGridSpec(
            num_scalar_prefetch=0,
            grid=grid,
            in_specs=in_specs,
            out_specs=pix_spec,
            scratch_shapes=[scratch],
        ),
        compiler_params=pltpu.CompilerParams(
            dimension_semantics=("parallel", "parallel"),
            vmem_limit_bytes=vmem_limit),
        cost_estimate=pl.CostEstimate(
            flops=int(flops),
            transcendentals=int(2 * C * N * HW),
            bytes_accessed=int(bytes_accessed)),
    )(r1, r2, *weights)
    # TODO(synk): if profiling shows exposed DMA, bump the two input pix_specs
    # to pipeline_mode=pl.Buffered(3).

    return out_rows.reshape(N, C, H, W)


# ---------------------------------------------------------------------------
# Parameters / reference
# ---------------------------------------------------------------------------

def init_params(channels, key):
    """Deterministic synthetic parameters matching the module's __init__ shapes."""
    C = channels
    k = jax.random.split(key, 6)
    scale = 0.1
    w1 = scale * jax.random.normal(k[0], (C, C), jnp.float32)
    b1 = scale * jax.random.normal(k[1], (C, 1), jnp.float32)
    w2 = scale * jax.random.normal(k[2], (C, C), jnp.float32)
    b2 = scale * jax.random.normal(k[3], (C, 1), jnp.float32)
    wo = scale * jax.random.normal(k[4], (C, 2 * C), jnp.float32)   # conv_out (C, 2C)
    bo = scale * jax.random.normal(k[5], (C, 1), jnp.float32)
    return {"w1": w1, "b1": b1, "w2": w2, "b2": b2, "wo": wo, "bo": bo}


def attention_fusion_ref(x1, x2, params):
    """Pure-JAX reference of the PyTorch forward (NCHW)."""
    N, C, H, W = x1.shape
    r1 = x1.reshape(N, C, H * W).astype(jnp.float32)
    r2 = x2.reshape(N, C, H * W).astype(jnp.float32)
    att1 = jax.nn.sigmoid(
        jnp.einsum("oc,ncp->nop", params["w1"], r1) + params["b1"][None])
    att2 = jax.nn.sigmoid(
        jnp.einsum("oc,ncp->nop", params["w2"], r2) + params["b2"][None])
    f = jnp.concatenate([r1 * att1, r2 * att2], axis=1)
    out = jnp.einsum("oc,ncp->nop", params["wo"], f) + params["bo"][None]
    return out.reshape(N, C, H, W).astype(x1.dtype)


if __name__ == "__main__":
    key = jax.random.PRNGKey(0)

    def _check(N, C, H, W, **kw):
        kk = jax.random.fold_in(key, N * 100000 + C * 1000 + H * 10 + W)
        k1, k2, kp = jax.random.split(kk, 3)
        x1 = jax.random.normal(k1, (N, C, H, W), jnp.float32)
        x2 = jax.random.normal(k2, (N, C, H, W), jnp.float32)
        params = init_params(C, kp)
        out = jax.block_until_ready(attention_fusion_pallas(x1, x2, params, **kw))
        ref = attention_fusion_ref(x1, x2, params)
        assert out.shape == ref.shape
        err = float(jnp.max(jnp.abs(out - ref)))
        assert jnp.allclose(out, ref, atol=1e-4, rtol=1e-4), \
            f"mismatch N={N} C={C} H={H} W={W}: max abs err {err}"

    # main case: tiny-C stacked path, batch-blocked, lane tile split for 2 TCs
    _check(2, 4, 16, 16)
    # ragged HW tail (HW % tile_hw != 0) -> exercises masked writeback
    _check(1, 4, 10, 20, tile_hw=128)
    # HW < 128 (narrow lane tile equal to the full dim)
    _check(2, 4, 5, 7)
    # split-path kernel (C >= 8): two attention matmuls + fused output conv
    _check(1, 16, 8, 8)

    print("KERNEL_OK")
</pallas_src>

<mosaic_0001>
module attributes {stable_mosaic.version = 11 : i64} {
  func.func @_fusion_kernel_stacked(%arg0: i32, %arg1: i32, %arg2: memref<2x4x128xf32, #tpu.memory_space<vmem>>, %arg3: memref<2x4x128xf32, #tpu.memory_space<vmem>>, %arg4: memref<8x8xf32, #tpu.memory_space<vmem>>, %arg5: memref<8x1xf32, #tpu.memory_space<vmem>>, %arg6: memref<4x8xf32, #tpu.memory_space<vmem>>, %arg7: memref<4x1xf32, #tpu.memory_space<vmem>>, %arg8: memref<2x4x128xf32, #tpu.memory_space<vmem>>, %arg9: memref<2x8x128xf32, #tpu.memory_space<vmem>>) attributes {dimension_semantics = [#tpu.dimension_semantics<parallel>, #tpu.dimension_semantics<parallel>], iteration_bounds = array<i64: 1, 2>, scalar_prefetch = 0 : i64, scratch_operands = 1 : i64, tpu.core_type = #tpu.core_type<tc>, window_params = [{transform_indices = @transform_0, window_bounds = array<i64: 2, 4, 128>}, {transform_indices = @transform_1, window_bounds = array<i64: 2, 4, 128>}, {pipeline_mode = #tpu.pipeline_mode<synchronous>, transform_indices = @transform_2, window_bounds = array<i64: 8, 8>}, {pipeline_mode = #tpu.pipeline_mode<synchronous>, transform_indices = @transform_3, window_bounds = array<i64: 8, 1>}, {pipeline_mode = #tpu.pipeline_mode<synchronous>, transform_indices = @transform_4, window_bounds = array<i64: 4, 8>}, {pipeline_mode = #tpu.pipeline_mode<synchronous>, transform_indices = @transform_5, window_bounds = array<i64: 4, 1>}, {transform_indices = @transform_6, window_bounds = array<i64: 2, 4, 128>}]} {
    %c0 = arith.constant 0 : index
    %c0_0 = arith.constant 0 : index
    %c0_1 = arith.constant 0 : index
    %0 = vector.load %arg2[%c0, %c0_0, %c0_1] : memref<2x4x128xf32, #tpu.memory_space<vmem>>, vector<2x4x128xf32>
    %c0_2 = arith.constant 0 : index
    %c0_3 = arith.constant 0 : index
    %c0_4 = arith.constant 0 : index
    %1 = vector.load %arg9[%c0_2, %c0_3, %c0_4] : memref<2x8x128xf32, #tpu.memory_space<vmem>>, vector<2x4x128xf32>
    tpu.vector_store %arg9[%c0_2, %c0_3, %c0_4], %0 {strides = array<i32>} : memref<2x8x128xf32, #tpu.memory_space<vmem>>, vector<2x4x128xf32>,
    %c0_5 = arith.constant 0 : index
    %c0_6 = arith.constant 0 : index
    %c0_7 = arith.constant 0 : index
    %2 = vector.load %arg3[%c0_5, %c0_6, %c0_7] : memref<2x4x128xf32, #tpu.memory_space<vmem>>, vector<2x4x128xf32>
    %c0_8 = arith.constant 0 : index
    %c4 = arith.constant 4 : index
    %c0_9 = arith.constant 0 : index
    %3 = vector.load %arg9[%c0_8, %c4, %c0_9] : memref<2x8x128xf32, #tpu.memory_space<vmem>>, vector<2x4x128xf32>
    tpu.vector_store %arg9[%c0_8, %c4, %c0_9], %2 {strides = array<i32>} : memref<2x8x128xf32, #tpu.memory_space<vmem>>, vector<2x4x128xf32>,
    %c0_10 = arith.constant 0 : index
    %c0_11 = arith.constant 0 : index
    %4 = vector.load %arg4[%c0_10, %c0_11] : memref<8x8xf32, #tpu.memory_space<vmem>>, vector<8x8xf32>
    %c0_12 = arith.constant 0 : index
    %c0_13 = arith.constant 0 : index
    %5 = vector.load %arg5[%c0_12, %c0_13] : memref<8x1xf32, #tpu.memory_space<vmem>>, vector<8x1xf32>
    %c0_14 = arith.constant 0 : index
    %c0_15 = arith.constant 0 : index
    %6 = vector.load %arg6[%c0_14, %c0_15] : memref<4x8xf32, #tpu.memory_space<vmem>>, vector<4x8xf32>
    %c0_16 = arith.constant 0 : index
    %c0_17 = arith.constant 0 : index
    %7 = vector.load %arg7[%c0_16, %c0_17] : memref<4x1xf32, #tpu.memory_space<vmem>>, vector<4x1xf32>
    %c0_18 = arith.constant 0 : index
    %c0_19 = arith.constant 0 : index
    %c0_20 = arith.constant 0 : index
    %8 = vector.load %arg9[%c0_18, %c0_19, %c0_20] : memref<2x8x128xf32, #tpu.memory_space<vmem>>, vector<1x8x128xf32>
    %9 = vector.shape_cast %8 : vector<1x8x128xf32> to vector<8x128xf32>
    %cst = arith.constant dense<0.000000e+00> : vector<8x128xf32>
    %10 = tpu.matmul %4, %9, %cst {dimension_numbers = #tpu.dot_dimension_numbers<[1], [0], [0], [1], [0, 0, 1, 1], [], []>} : vector<8x8xf32>, vector<8x128xf32>, vector<8x128xf32> -> vector<8x128xf32>
    %11 = vector.broadcast %5 : vector<8x1xf32> to vector<8x128xf32>
    %12 = arith.addf %10, %11 : vector<8x128xf32>
    %13 = arith.negf %12 : vector<8x128xf32>
    %14 = math.exp %13 : vector<8x128xf32>
    %cst_21 = arith.constant 1.000000e+00 : f32
    %15 = vector.broadcast %cst_21 : f32 to vector<8x128xf32>
    %16 = arith.addf %15, %14 : vector<8x128xf32>
    %17 = arith.divf %15, %16 : vector<8x128xf32>
    %18 = arith.mulf %9, %17 : vector<8x128xf32>
    %cst_22 = arith.constant dense<0.000000e+00> : vector<4x128xf32>
    %19 = tpu.matmul %6, %18, %cst_22 {dimension_numbers = #tpu.dot_dimension_numbers<[1], [0], [0], [1], [0, 0, 1, 1], [], []>} : vector<4x8xf32>, vector<8x128xf32>, vector<4x128xf32> -> vector<4x128xf32>
    %20 = vector.broadcast %7 : vector<4x1xf32> to vector<4x128xf32>
    %21 = arith.addf %19, %20 : vector<4x128xf32>
    %c0_23 = arith.constant 0 : index
    %c0_24 = arith.constant 0 : index
    %c0_25 = arith.constant 0 : index
    %22 = vector.load %arg8[%c0_23, %c0_24, %c0_25] : memref<2x4x128xf32, #tpu.memory_space<vmem>>, vector<1x4x128xf32>
    %23 = vector.shape_cast %22 : vector<1x4x128xf32> to vector<4x128xf32>
    %24 = vector.shape_cast %21 : vector<4x128xf32> to vector<1x4x128xf32>
    tpu.vector_store %arg8[%c0_23, %c0_24, %c0_25], %24 {strides = array<i32>} : memref<2x4x128xf32, #tpu.memory_space<vmem>>, vector<1x4x128xf32>,
    %c1 = arith.constant 1 : index
    %c0_26 = arith.constant 0 : index
    %c0_27 = arith.constant 0 : index
    %25 = vector.load %arg9[%c1, %c0_26, %c0_27] : memref<2x8x128xf32, #tpu.memory_space<vmem>>, vector<1x8x128xf32>
    %26 = vector.shape_cast %25 : vector<1x8x128xf32> to vector<8x128xf32>
    %cst_28 = arith.constant dense<0.000000e+00> : vector<8x128xf32>
    %27 = tpu.matmul %4, %26, %cst_28 {dimension_numbers = #tpu.dot_dimension_numbers<[1], [0], [0], [1], [0, 0, 1, 1], [], []>} : vector<8x8xf32>, vector<8x128xf32>, vector<8x128xf32> -> vector<8x128xf32>
    %28 = vector.broadcast %5 : vector<8x1xf32> to vector<8x128xf32>
    %29 = arith.addf %27, %28 : vector<8x128xf32>
    %30 = arith.negf %29 : vector<8x128xf32>
    %31 = math.exp %30 : vector<8x128xf32>
    %cst_29 = arith.constant 1.000000e+00 : f32
    %32 = vector.broadcast %cst_29 : f32 to vector<8x128xf32>
    %33 = arith.addf %32, %31 : vector<8x128xf32>
    %34 = arith.divf %32, %33 : vector<8x128xf32>
    %35 = arith.mulf %26, %34 : vector<8x128xf32>
    %cst_30 = arith.constant dense<0.000000e+00> : vector<4x128xf32>
    %36 = tpu.matmul %6, %35, %cst_30 {dimension_numbers = #tpu.dot_dimension_numbers<[1], [0], [0], [1], [0, 0, 1, 1], [], []>} : vector<4x8xf32>, vector<8x128xf32>, vector<4x128xf32> -> vector<4x128xf32>
    %37 = vector.broadcast %7 : vector<4x1xf32> to vector<4x128xf32>
    %38 = arith.addf %36, %37 : vector<4x128xf32>
    %c1_31 = arith.constant 1 : index
    %c0_32 = arith.constant 0 : index
    %c0_33 = arith.constant 0 : index
    %39 = vector.load %arg8[%c1_31, %c0_32, %c0_33] : memref<2x4x128xf32, #tpu.memory_space<vmem>>, vector<1x4x128xf32>
    %40 = vector.shape_cast %39 : vector<1x4x128xf32> to vector<4x128xf32>
    %41 = vector.shape_cast %38 : vector<4x128xf32> to vector<1x4x128xf32>
    tpu.vector_store %arg8[%c1_31, %c0_32, %c0_33], %41 {strides = array<i32>} : memref<2x4x128xf32, #tpu.memory_space<vmem>>, vector<1x4x128xf32>,
    return
  }
  func.func @transform_0(%arg0: i32, %arg1: i32) -> (i32, i32, i32) {
    %c0_i32 = arith.constant 0 : i32
    %c0_i32_0 = arith.constant 0 : i32
    return %arg0, %c0_i32, %arg1 : i32, i32, i32
  }
  func.func @transform_1(%arg0: i32, %arg1: i32) -> (i32, i32, i32) {
    %c0_i32 = arith.constant 0 : i32
    %c0_i32_0 = arith.constant 0 : i32
    return %arg0, %c0_i32, %arg1 : i32, i32, i32
  }
  func.func @transform_2(%arg0: i32, %arg1: i32) -> (i32, i32) {
    %c0_i32 = arith.constant 0 : i32
    %c0_i32_0 = arith.constant 0 : i32
    %c0_i32_1 = arith.constant 0 : i32
    return %c0_i32, %c0_i32_0 : i32, i32
  }
  func.func @transform_3(%arg0: i32, %arg1: i32) -> (i32, i32) {
    %c0_i32 = arith.constant 0 : i32
    %c0_i32_0 = arith.constant 0 : i32
    %c0_i32_1 = arith.constant 0 : i32
    return %c0_i32, %c0_i32_0 : i32, i32
  }
  func.func @transform_4(%arg0: i32, %arg1: i32) -> (i32, i32) {
    %c0_i32 = arith.constant 0 : i32
    %c0_i32_0 = arith.constant 0 : i32
    %c0_i32_1 = arith.constant 0 : i32
    return %c0_i32, %c0_i32_0 : i32, i32
  }
  func.func @transform_5(%arg0: i32, %arg1: i32) -> (i32, i32) {
    %c0_i32 = arith.constant 0 : i32
    %c0_i32_0 = arith.constant 0 : i32
    %c0_i32_1 = arith.constant 0 : i32
    return %c0_i32, %c0_i32_0 : i32, i32
  }
  func.func @transform_6(%arg0: i32, %arg1: i32) -> (i32, i32, i32) {
    %c0_i32 = arith.constant 0 : i32
    %c0_i32_0 = arith.constant 0 : i32
    return %arg0, %c0_i32, %arg1 : i32, i32, i32
  }
}

</mosaic_0001>

<llo_original>
// kernel: tpu_custom_call.1
$region0: #{tpu_custom_call.1}
  #allocation0 [shape = 'u32[]', space=smem, size = 0x4, offset = 0x4, fixed_abs, tag = 'smem constant byte address 0x4 - core index']
  #allocation1 [shape = 'u32[144,128]{1,0:T(1,128)}', space=vmem, size = 0x12000, scoped, tag = 'internal scratch']
  #allocation2 [shape = 'f32[2,8,128]{2,1,0:T(8,128)}', space=vmem, size = 0x2000, scoped, tag = 'scratch operand']
  %s0 = inlined_call_operand.hbm [shape: f32[2,4,256], index: 0, kind: input, shape index: {}]
  %s1 = inlined_call_operand.hbm [shape: f32[2,4,256], index: 1, kind: input, shape index: {}]
  %s2 = inlined_call_operand.vmem [shape: f32[8,8], index: 2, kind: input, shape index: {}]
  %s3 = inlined_call_operand.vmem [shape: f32[8,1], index: 3, kind: input, shape index: {}]
  %s4 = inlined_call_operand.vmem [shape: f32[4,8], index: 4, kind: input, shape index: {}]
  %s5 = inlined_call_operand.vmem [shape: f32[4,1], index: 5, kind: input, shape index: {}]
  %s6 = inlined_call_operand.hbm [shape: f32[2,4,256], index: 6, kind: output, shape index: {}]
  %s7 = sld [smem:[#allocation0]]
  $region65: #{tpu_custom_call.1} parent=0
    _
  %s9 = ssub.s32 1, %s7
  %s10 = scalar_select 0, %s9, %s7
  $region1: #{tpu_custom_call.1} parent=0
    #allocation3 [shape = 'u8[8192]{0}', space=vmem, size = 0x2000, scoped, tag = 'input window, operand 0']
    #allocation4 [shape = 's32[2]{0}', space=sflag, size = 0x8, scoped, tag = 'scoped memory for tpu_custom_call.1']
    #allocation5 [shape = 's32[2]{0}', space=sflag, size = 0x8, scoped, tag = 'scoped memory for tpu_custom_call.1']
    #allocation6 [shape = 'u8[8192]{0}', space=vmem, size = 0x2000, scoped, tag = 'input window, operand 1']
    #allocation7 [shape = 's32[2]{0}', space=sflag, size = 0x8, scoped, tag = 'scoped memory for tpu_custom_call.1']
    #allocation8 [shape = 'u8[8192]{0}', space=vmem, size = 0x2000, scoped, tag = 'output window, operand 0']
    %11 = vsyncpa [#allocation4], 0
    %s12 = scalar_lea.sflag [#allocation4], 1
    %13 = vsyncpa %s12, 0
    %14 = vsyncpa [#allocation7], 0
    %s15 = scalar_lea.sflag [#allocation7], 1
    %16 = vsyncpa %s15, 0
    %17 = vsyncpa [#allocation5], 0
    %s18 = scalar_lea.sflag [#allocation5], 1
    %19 = vsyncpa %s18, 0
    loop: start=0, step=1, limit=4
    $region2: #{tpu_custom_call.1} parent=1 // loop_pre_header
      _
    $region3: #{tpu_custom_call.1} parent=1 // loop_header
      %s21 = sphi 0, %s25
      %p22 = scmp.ge.s32.totalorder %s21, 4
      %s28 = sphi 0, %s40
      %s29 = sphi 0, %s36
      %s30 = sphi 0, %s28
      %s31 = sphi 0, %s29
      %s32 = sphi 0, %s30
      %s33 = sphi 0, %s31
      %s45 = sphi 0, %s47
      %s48 = sphi 0, %s45
      %s49 = sphi 0, %s48
      %s65 = sphi 0, %s49
      %s73 = sphi 0, %s75
      %s76 = sphi 0, %s73
      %s77 = sphi 0, %s76
      %s93 = sphi 0, %s77
      %s97 = sphi 0, %s97
      %s99 = sphi 0, %s97
      %s100 = sphi 0, %s99
      %s114 = sphi 0, %s100
      %s118 = sphi 0, %s118
      %s120 = sphi 0, %s118
      %s121 = sphi 0, %s120
      %s135 = sphi 0, %s121
      %s139 = sphi 0, %s139
      %s141 = sphi 0, %s139
      %s142 = sphi 0, %s141
      %s156 = sphi 0, %s142
      %s160 = sphi 0, %s160
      %s162 = sphi 0, %s160
      %s163 = sphi 0, %s162
      %s177 = sphi 0, %s163
      %s185 = sphi 0, %s187
      %s188 = sphi 0, %s185
      %s189 = sphi 0, %s188
      %s205 = sphi 0, %s189
    $region4: #{tpu_custom_call.1} parent=1 // loop_header_branch
      %24 = sbr.rel (%p22) target = $region8
    $region5: #{tpu_custom_call.1} parent=1 // loop_body
      %s26 = ssub.s32 %s21, 1
      %s27 = ssub.s32 %s21, 2
      %s34 = sadd.s32 1, %s29
      %p35 = scmp.ge.s32.totalorder %s34, 2
      %s36 = scalar_select %p35, 0, %s34
      %s37 = sadd.s32 1, %s28
      %s38 = scalar_select %p35, %s37, %s28
      %p39 = scmp.ge.s32.totalorder %s38, 1
      %s40 = scalar_select %p39, 0, %s38
      %s41 = ssub.s32 %s28, %s40
      %s42 = ssub.s32 %s29, %s36
      %s43 = sor.u32 %s41, %s42
      %p44 = scmp.eq.s32.totalorder %s43, 0
      %s46 = sadd.s32 %s45, 1
      %s47 = scalar_select %p44, %s45, %s46
      %p50 = pneg %p44
      %p51 = scmp.eq.s32.totalorder %s21, 1
      %p52 = por %p50, %p51
      %p53 = scmp.ne.s32.totalorder %s45, %s48
      %p54 = scmp.eq.s32.totalorder %s21, 0
      %p55 = por %p53, %p54
      %p56 = scmp.ne.s32.totalorder %s45, %s48
      %p57 = scmp.eq.s32.totalorder %s26, 1
      %p58 = por %p56, %p57
      %p59 = scmp.ne.s32.totalorder %s48, %s49
      %p60 = scmp.eq.s32.totalorder %s26, 0
      %p61 = por %p59, %p60
      %p62 = scmp.ne.s32.totalorder %s48, %s49
      %p63 = scmp.eq.s32.totalorder %s27, 1
      %p64 = por %p62, %p63
      %p66 = scmp.ne.s32.totalorder %s49, %s65
      %p67 = scmp.eq.s32.totalorder %s27, 0
      %p68 = por %p66, %p67
      %s69 = ssub.s32 %s28, %s40
      %s70 = ssub.s32 %s29, %s36
      %s71 = sor.u32 %s69, %s70
      %p72 = scmp.eq.s32.totalorder %s71, 0
      %s74 = sadd.s32 %s73, 1
      %s75 = scalar_select %p72, %s73, %s74
      %p78 = pneg %p72
      %p79 = scmp.eq.s32.totalorder %s21, 1
      %p80 = por %p78, %p79
      %p81 = scmp.ne.s32.totalorder %s73, %s76
      %p82 = scmp.eq.s32.totalorder %s21, 0
      %p83 = por %p81, %p82
      %p84 = scmp.ne.s32.totalorder %s73, %s76
      %p85 = scmp.eq.s32.totalorder %s26, 1
      %p86 = por %p84, %p85
      %p87 = scmp.ne.s32.totalorder %s76, %s77
      %p88 = scmp.eq.s32.totalorder %s26, 0
      %p89 = por %p87, %p88
      %p90 = scmp.ne.s32.totalorder %s76, %s77
      %p91 = scmp.eq.s32.totalorder %s27, 1
      %p92 = por %p90, %p91
      %p94 = scmp.ne.s32.totalorder %s77, %s93
      %p95 = scmp.eq.s32.totalorder %s27, 0
      %p96 = por %p94, %p95
      %s98 = sadd.s32 %s97, 1
      %p101 = scmp.eq.s32.totalorder %s21, 1
      %p102 = scmp.ne.s32.totalorder %s97, %s99
      %p103 = scmp.eq.s32.totalorder %s21, 0
      %p104 = por %p102, %p103
      %p105 = scmp.ne.s32.totalorder %s97, %s99
      %p106 = scmp.eq.s32.totalorder %s26, 1
      %p107 = por %p105, %p106
      %p108 = scmp.ne.s32.totalorder %s99, %s100
      %p109 = scmp.eq.s32.totalorder %s26, 0
      %p110 = por %p108, %p109
      %p111 = scmp.ne.s32.totalorder %s99, %s100
      %p112 = scmp.eq.s32.totalorder %s27, 1
      %p113 = por %p111, %p112
      %p115 = scmp.ne.s32.totalorder %s100, %s114
      %p116 = scmp.eq.s32.totalorder %s27, 0
      %p117 = por %p115, %p116
      %s119 = sadd.s32 %s118, 1
      %p122 = scmp.eq.s32.totalorder %s21, 1
      %p123 = scmp.ne.s32.totalorder %s118, %s120
      %p124 = scmp.eq.s32.totalorder %s21, 0
      %p125 = por %p123, %p124
      %p126 = scmp.ne.s32.totalorder %s118, %s120
      %p127 = scmp.eq.s32.totalorder %s26, 1
      %p128 = por %p126, %p127
      %p129 = scmp.ne.s32.totalorder %s120, %s121
      %p130 = scmp.eq.s32.totalorder %s26, 0
      %p131 = por %p129, %p130
      %p132 = scmp.ne.s32.totalorder %s120, %s121
      %p133 = scmp.eq.s32.totalorder %s27, 1
      %p134 = por %p132, %p133
      %p136 = scmp.ne.s32.totalorder %s121, %s135
      %p137 = scmp.eq.s32.totalorder %s27, 0
      %p138 = por %p136, %p137
      %s140 = sadd.s32 %s139, 1
      %p143 = scmp.eq.s32.totalorder %s21, 1
      %p144 = scmp.ne.s32.totalorder %s139, %s141
      %p145 = scmp.eq.s32.totalorder %s21, 0
      %p146 = por %p144, %p145
      %p147 = scmp.ne.s32.totalorder %s139, %s141
      %p148 = scmp.eq.s32.totalorder %s26, 1
      %p149 = por %p147, %p148
      %p150 = scmp.ne.s32.totalorder %s141, %s142
      %p151 = scmp.eq.s32.totalorder %s26, 0
      %p152 = por %p150, %p151
      %p153 = scmp.ne.s32.totalorder %s141, %s142
      %p154 = scmp.eq.s32.totalorder %s27, 1
      %p155 = por %p153, %p154
      %p157 = scmp.ne.s32.totalorder %s142, %s156
      %p158 = scmp.eq.s32.totalorder %s27, 0
      %p159 = por %p157, %p158
      %s161 = sadd.s32 %s160, 1
      %p164 = scmp.eq.s32.totalorder %s21, 1
      %p165 = scmp.ne.s32.totalorder %s160, %s162
      %p166 = scmp.eq.s32.totalorder %s21, 0
      %p167 = por %p165, %p166
      %p168 = scmp.ne.s32.totalorder %s160, %s162
      %p169 = scmp.eq.s32.totalorder %s26, 1
      %p170 = por %p168, %p169
      %p171 = scmp.ne.s32.totalorder %s162, %s163
      %p172 = scmp.eq.s32.totalorder %s26, 0
      %p173 = por %p171, %p172
      %p174 = scmp.ne.s32.totalorder %s162, %s163
      %p175 = scmp.eq.s32.totalorder %s27, 1
      %p176 = por %p174, %p175
      %p178 = scmp.ne.s32.totalorder %s163, %s177
      %p179 = scmp.eq.s32.totalorder %s27, 0
      %p180 = por %p178, %p179
      %s181 = ssub.s32 %s28, %s40
      %s182 = ssub.s32 %s29, %s36
      %s183 = sor.u32 %s181, %s182
      %p184 = scmp.eq.s32.totalorder %s183, 0
      %s186 = sadd.s32 %s185, 1
      %s187 = scalar_select %p184, %s185, %s186
      %p190 = pneg %p184
      %p191 = scmp.eq.s32.totalorder %s21, 1
      %p192 = por %p190, %p191
      %p193 = scmp.ne.s32.totalorder %s185, %s188
      %p194 = scmp.eq.s32.totalorder %s21, 0
      %p195 = por %p193, %p194
      %p196 = scmp.ne.s32.totalorder %s185, %s188
      %p197 = scmp.eq.s32.totalorder %s26, 1
      %p198 = por %p196, %p197
      %p199 = scmp.ne.s32.totalorder %s188, %s189
      %p200 = scmp.eq.s32.totalorder %s26, 0
      %p201 = por %p199, %p200
      %p202 = scmp.ne.s32.totalorder %s188, %s189
      %p203 = scmp.eq.s32.totalorder %s27, 1
      %p204 = por %p202, %p203
      %p206 = scmp.ne.s32.totalorder %s189, %s205
      %p207 = scmp.eq.s32.totalorder %s27, 0
      %p208 = por %p206, %p207
      %p209 = scmp.le.s32.totalorder 1, %s21
      %p210 = scmp.lt.s32.totalorder %s21, 3
      %p211 = pnand %p209, %p210
      %p212 = pneg %p211
      // Predicated region
      $region9: #{tpu_custom_call.1} parent=5 // pred_check
        _
      $region10: #{tpu_custom_call.1} parent=5 // pred_check_branch
        %214 = sbr.rel (%p211) target = $region12
      $region11: #{tpu_custom_call.1} parent=5 // pred_region
        %s215 = ssub.s32 %s21, 1
        // Predicated region
        $region13: #{tpu_custom_call.1} parent=11 // pred_check
          %p216 = pneg %p110
        $region14: #{tpu_custom_call.1} parent=11 // pred_check_branch
          %218 = sbr.rel (%p216) target = $region16
        $region15: #{tpu_custom_call.1} parent=11 // pred_region
          _
        $region16: #{tpu_custom_call.1} parent=11 // pred_fallthru
          _
        // Predicated region
        $region17: #{tpu_custom_call.1} parent=11 // pred_check
          %p219 = pneg %p131
        $region18: #{tpu_custom_call.1} parent=11 // pred_check_branch
          %221 = sbr.rel (%p219) target = $region20
        $region19: #{tpu_custom_call.1} parent=11 // pred_region
          _
        $region20: #{tpu_custom_call.1} parent=11 // pred_fallthru
          _
        // Predicated region
        $region21: #{tpu_custom_call.1} parent=11 // pred_check
          %p222 = pneg %p152
        $region22: #{tpu_custom_call.1} parent=11 // pred_check_branch
          %224 = sbr.rel (%p222) target = $region24
        $region23: #{tpu_custom_call.1} parent=11 // pred_region
          _
        $region24: #{tpu_custom_call.1} parent=11 // pred_fallthru
          _
        // Predicated region
        $region25: #{tpu_custom_call.1} parent=11 // pred_check
          %p225 = pneg %p173
        $region26: #{tpu_custom_call.1} parent=11 // pred_check_branch
          %227 = sbr.rel (%p225) target = $region28
        $region27: #{tpu_custom_call.1} parent=11 // pred_region
          _
        $region28: #{tpu_custom_call.1} parent=11 // pred_fallthru
          _
      $region12: #{tpu_custom_call.1} parent=5 // pred_fallthru
        _
      %p228 = scmp.lt.s32.totalorder %s21, 2
      // Predicated region
      $region29: #{tpu_custom_call.1} parent=5 // pred_check
        %p229 = pneg %p228
      $region30: #{tpu_custom_call.1} parent=5 // pred_check_branch
        %231 = sbr.rel (%p229) target = $region32
      $region31: #{tpu_custom_call.1} parent=5 // pred_region
        // Predicated region
        $region33: #{tpu_custom_call.1} parent=31 // pred_check
          %p232 = pneg %p55
        $region34: #{tpu_custom_call.1} parent=31 // pred_check_branch
          %234 = sbr.rel (%p232) target = $region36
        $region35: #{tpu_custom_call.1} parent=31 // pred_region
          %s235 = sand.u32 %s45, 1
          %s236 = scalar_lea.sflag [#allocation4], %s235
          %s237 = sand.u32 %s45, 1
          %s238 = smul.addr %s237, 8
          %s239 = scalar_lea.vmem [#allocation3], %s238
          %s240 = smul.u32 2, %s28
          %s242 = ssub.s32 128, 128
          %243 = vsyncadd %s236, %s242
          %s244 = smul.addr %s240, 2
          %s245 = sadd.s32 %s29, %s244
          %s246 = smul.addr %s245, 64
          %s247 = scalar_lea.hbm %s0, %s246
          %s248 = sshll.u32 %s239, 4
          %s249 = int_to_ptr.vmem [resolvable:$true] %s248
          %254 = dma.hbm_to_vmem [thread:$0]  %s247, 128, %s249, %s236, 128, 64, 4
        $region36: #{tpu_custom_call.1} parent=31 // pred_fallthru
          _
        // Predicated region
        $region37: #{tpu_custom_call.1} parent=31 // pred_check
          %p255 = pneg %p83
        $region38: #{tpu_custom_call.1} parent=31 // pred_check_branch
          %257 = sbr.rel (%p255) target = $region40
        $region39: #{tpu_custom_call.1} parent=31 // pred_region
          %s258 = sand.u32 %s73, 1
          %s259 = scalar_lea.sflag [#allocation7], %s258
          %s260 = sand.u32 %s73, 1
          %s261 = smul.addr %s260, 8
          %s262 = scalar_lea.vmem [#allocation6], %s261
          %s263 = smul.u32 2, %s28
          %s265 = ssub.s32 128, 128
          %266 = vsyncadd %s259, %s265
          %s267 = smul.addr %s263, 2
          %s268 = sadd.s32 %s29, %s267
          %s269 = smul.addr %s268, 64
          %s270 = scalar_lea.hbm %s1, %s269
          %s271 = sshll.u32 %s262, 4
          %s272 = int_to_ptr.vmem [resolvable:$true] %s271
          %277 = dma.hbm_to_vmem [thread:$0]  %s270, 128, %s272, %s259, 128, 64, 4
        $region40: #{tpu_custom_call.1} parent=31 // pred_fallthru
          _
      $region32: #{tpu_custom_call.1} parent=5 // pred_fallthru
        _
      %p278 = scmp.le.s32.totalorder 1, %s21
      %p279 = scmp.lt.s32.totalorder %s21, 3
      %p280 = pnand %p278, %p279
      %p281 = pneg %p280
      // Predicated region
      $region41: #{tpu_custom_call.1} parent=5 // pred_check
        _
      $region42: #{tpu_custom_call.1} parent=5 // pred_check_branch
        %283 = sbr.rel (%p280) target = $region44
      $region43: #{tpu_custom_call.1} parent=5 // pred_region
        %s284 = ssub.s32 %s21, 1
        %s285 = sand.u32 %s48, 1
        %s286 = scalar_lea.sflag [#allocation4], %s285
        %s287 = sand.u32 %s48, 1
        %s288 = smul.addr %s287, 8
        %s289 = scalar_lea.vmem [#allocation3], %s288
        // Predicated region
        $region45: #{tpu_custom_call.1} parent=43 // pred_check
          %p290 = pneg %p61
        $region46: #{tpu_custom_call.1} parent=43 // pred_check_branch
          %292 = sbr.rel (%p290) target = $region48
        $region47: #{tpu_custom_call.1} parent=43 // pred_region
          %293 = dma.done %s286, 128
        $region48: #{tpu_custom_call.1} parent=43 // pred_fallthru
          _
        %s294 = sand.u32 %s76, 1
        %s295 = scalar_lea.sflag [#allocation7], %s294
        %s296 = sand.u32 %s76, 1
        %s297 = smul.addr %s296, 8
        %s298 = scalar_lea.vmem [#allocation6], %s297
        // Predicated region
        $region49: #{tpu_custom_call.1} parent=43 // pred_check
          %p299 = pneg %p89
        $region50: #{tpu_custom_call.1} parent=43 // pred_check_branch
          %301 = sbr.rel (%p299) target = $region52
        $region51: #{tpu_custom_call.1} parent=43 // pred_region
          %302 = dma.done %s295, 128
        $region52: #{tpu_custom_call.1} parent=43 // pred_fallthru
          _
        %s303 = sand.u32 %s48, 1
        %s304 = scalar_lea.sflag [#allocation4], %s303
        %s305 = sand.u32 %s48, 1
        %s306 = smul.addr %s305, 8
        %s307 = scalar_lea.vmem [#allocation3], %s306
        %p308 = pneg %p61
        %p309 = pneg %p58
        %s310 = sand.u32 %s76, 1
        %s311 = scalar_lea.sflag [#allocation7], %s310
        %s312 = sand.u32 %s76, 1
        %s313 = smul.addr %s312, 8
        %s314 = scalar_lea.vmem [#allocation6], %s313
        %p315 = pneg %p89
        %p316 = pneg %p86
        %p317 = pneg %p110
        %p318 = pneg %p107
        %p319 = pneg %p131
        %p320 = pneg %p128
        %p321 = pneg %p152
        %p322 = pneg %p149
        %p323 = pneg %p173
        %p324 = pneg %p170
        %p325 = pneg %p201
        %p326 = pneg %p198
        %s327 = sand.u32 %s188, 1
        %s328 = scalar_lea.sflag [#allocation5], %s327
        %s329 = sand.u32 %s188, 1
        %s330 = smul.addr %s329, 8
        %s331 = scalar_lea.vmem [#allocation8], %s330
        %s332 = smul.u32 2, %s30
        %s333 = smul.u32 2, %s30
        %s334 = smul.u32 2, %s30
        %v335 = vld [vmem:[%s289] sm:$0xf]
        %v336 = vld [vmem:[%s289 + $0x4] sm:$0xf]
        %337 = vst [vmem:[#allocation2] sm:$0xf] %v335
        %338 = vst [vmem:[#allocation2 + $0x8] sm:$0xf] %v336
        %v339 = vld [vmem:[%s298] sm:$0xf]
        %v340 = vld [vmem:[%s298 + $0x4] sm:$0xf]
        %341 = vst [vmem:[#allocation2 + $0x4] sm:$0xf] %v339
        %342 = vst [vmem:[#allocation2 + $0xc] sm:$0xf] %v340
        %v343 = vld [vmem:[%s2] sm:$0xff]
        %v344 = vld [vmem:[%s3] sm:$0xff]
        %v345 = vld [vmem:[%s4] sm:$0xf]
        %v346 = vld [vmem:[%s5] sm:$0xf]
        %v347 = vld [vmem:[#allocation2] sm:$0xff]
        %349 = vset.pattern.permute.xlu0 0
        %350 = vperm.xlu0 %349, %v344
        %v351 = vpop.permute.xlu0 %350
        %vm353 = vcmask 64512
        %v355 = vsel %vm353, %v343, 0
        %357 = vmatprep.subr.mxu0 0.0
        %358 = vmatpush1.msra.mxu0 0.0
        %359 = vmatprep.subr.mxu0 0.0
        %360 = vmatpush1.msra.mxu0 0.0
        %361 = vmatprep.subr.mxu0 0.0
        %362 = vmatpush1.msra.mxu0 0.0
        %363 = vmatprep.subr.mxu0 0.0
        %364 = vmatpush1.msra.mxu0 0.0
        %365 = vmatprep.subr.mxu0 0.0
        %366 = vmatpush1.msra.mxu0 0.0
        %367 = vmatprep.subr.mxu0 0.0
        %368 = vmatpush1.msra.mxu0 0.0
        %369 = vmatprep.subr.mxu0 0.0
        %370 = vmatpush1.msra.mxu0 0.0
        %371 = vmatprep.subr.mxu0 0.0
        %372 = vmatpush1.msra.mxu0 0.0
        %373 = vmatprep.subr.mxu0 0.0
        %374 = vmatpush1.msra.mxu0 0.0
        %375 = vmatprep.subr.mxu0 0.0
        %376 = vmatpush1.msra.mxu0 0.0
        %377 = vmatprep.subr.mxu0 0.0
        %378 = vmatpush1.msra.mxu0 0.0
        %379 = vmatprep.subr.mxu0 0.0
        %380 = vmatpush1.msra.mxu0 0.0
        %381 = vmatprep.subr.mxu0 0.0
        %382 = vmatpush1.msra.mxu0 0.0
        %383 = vmatprep.subr.mxu0 0.0
        %384 = vmatpush1.msra.mxu0 0.0
        %385 = vmatprep.subr.mxu0 0.0
        %386 = vmatpush1.msra.mxu0 0.0
        %387 = vmatprep.subr.mxu0 0.0
        %388 = vmatpush1.msra.mxu0 %v347
        %389 = vmatprep.subr.mxu0 0.0
        %390 = vmatpush2.msra.mxu0 0.0
        %391 = vmatprep.subr.mxu0 0.0
        %392 = vmatpush2.msra.mxu0 0.0
        %393 = vmatprep.subr.mxu0 0.0
        %394 = vmatpush2.msra.mxu0 0.0
        %395 = vmatprep.subr.mxu0 0.0
        %396 = vmatpush2.msra.mxu0 0.0
        %397 = vmatprep.subr.mxu0 0.0
        %398 = vmatpush2.msra.mxu0 0.0
        %399 = vmatprep.subr.mxu0 0.0
        %400 = vmatpush2.msra.mxu0 0.0
        %401 = vmatprep.subr.mxu0 0.0
        %402 = vmatpush2.msra.mxu0 0.0
        %403 = vmatprep.subr.mxu0 0.0
        %404 = vmatpush2.msra.mxu0 0.0
        %405 = vmatprep.subr.mxu0 0.0
        %406 = vmatpush2.msra.mxu0 0.0
        %407 = vmatprep.subr.mxu0 0.0
        %408 = vmatpush2.msra.mxu0 0.0
        %409 = vmatprep.subr.mxu0 0.0
        %410 = vmatpush2.msra.mxu0 0.0
        %411 = vmatprep.subr.mxu0 0.0
        %412 = vmatpush2.msra.mxu0 0.0
        %413 = vmatprep.subr.mxu0 0.0
        %414 = vmatpush2.msra.mxu0 0.0
        %415 = vmatprep.subr.mxu0 0.0
        %416 = vmatpush2.msra.mxu0 0.0
        %417 = vmatprep.subr.mxu0 0.0
        %418 = vmatpush2.msra.mxu0 0.0
        %419 = vmatprep.subr.mxu0 0.0
        %420 = vmatpush2.msra.mxu0 0.0
        %421 = vmatprep.mubr.f32.mxu0 0.0
        %422 = vmatmul.mubr.f32.gmra.mxu0 %v355
        %v423 = vpop.f32.mrf.mxu0
        %v424 = vadd.f32 %v351, %v423
        %v425 = vpop.f32.mrf.mxu0
        %426 = vdwg.mxu0
        %v427 = vxor.u32 %v424, 2147483648
        %v428 = vmul.f32 %v427, 1.442695
        %v429 = vpow.pop %v428
        %v430 = vadd.f32 %v429, 1.0
        %v431 = vrcp.pop %v430
        %v432 = vmul.f32 1.0, %v431
        %v433 = vmul.f32 %v347, %v432
        %435 = vset.pattern.permute.xlu0 0
        %436 = vperm.xlu0 %435, %v346
        %v437 = vpop.permute.xlu0 %436
        %v440 = vsel %vm353, %v345, 0
        %442 = vmatprep.subr.mxu0 0.0
        %443 = vmatpush1.msra.mxu0 0.0
        %444 = vmatprep.subr.mxu0 0.0
        %445 = vmatpush1.msra.mxu0 0.0
        %446 = vmatprep.subr.mxu0 0.0
        %447 = vmatpush1.msra.mxu0 0.0
        %448 = vmatprep.subr.mxu0 0.0
        %449 = vmatpush1.msra.mxu0 0.0
        %450 = vmatprep.subr.mxu0 0.0
        %451 = vmatpush1.msra.mxu0 0.0
        %452 = vmatprep.subr.mxu0 0.0
        %453 = vmatpush1.msra.mxu0 0.0
        %454 = vmatprep.subr.mxu0 0.0
        %455 = vmatpush1.msra.mxu0 0.0
        %456 = vmatprep.subr.mxu0 0.0
        %457 = vmatpush1.msra.mxu0 0.0
        %458 = vmatprep.subr.mxu0 0.0
        %459 = vmatpush1.msra.mxu0 0.0
        %460 = vmatprep.subr.mxu0 0.0
        %461 = vmatpush1.msra.mxu0 0.0
        %462 = vmatprep.subr.mxu0 0.0
        %463 = vmatpush1.msra.mxu0 0.0
        %464 = vmatprep.subr.mxu0 0.0
        %465 = vmatpush1.msra.mxu0 0.0
        %466 = vmatprep.subr.mxu0 0.0
        %467 = vmatpush1.msra.mxu0 0.0
        %468 = vmatprep.subr.mxu0 0.0
        %469 = vmatpush1.msra.mxu0 0.0
        %470 = vmatprep.subr.mxu0 0.0
        %471 = vmatpush1.msra.mxu0 0.0
        %472 = vmatprep.subr.mxu0 0.0
        %473 = vmatpush1.msra.mxu0 %v433
        %474 = vmatprep.subr.mxu0 0.0
        %475 = vmatpush2.msra.mxu0 0.0
        %476 = vmatprep.subr.mxu0 0.0
        %477 = vmatpush2.msra.mxu0 0.0
        %478 = vmatprep.subr.mxu0 0.0
        %479 = vmatpush2.msra.mxu0 0.0
        %480 = vmatprep.subr.mxu0 0.0
        %481 = vmatpush2.msra.mxu0 0.0
        %482 = vmatprep.subr.mxu0 0.0
        %483 = vmatpush2.msra.mxu0 0.0
        %484 = vmatprep.subr.mxu0 0.0
        %485 = vmatpush2.msra.mxu0 0.0
        %486 = vmatprep.subr.mxu0 0.0
        %487 = vmatpush2.msra.mxu0 0.0
        %488 = vmatprep.subr.mxu0 0.0
        %489 = vmatpush2.msra.mxu0 0.0
        %490 = vmatprep.subr.mxu0 0.0
        %491 = vmatpush2.msra.mxu0 0.0
        %492 = vmatprep.subr.mxu0 0.0
        %493 = vmatpush2.msra.mxu0 0.0
        %494 = vmatprep.subr.mxu0 0.0
        %495 = vmatpush2.msra.mxu0 0.0
        %496 = vmatprep.subr.mxu0 0.0
        %497 = vmatpush2.msra.mxu0 0.0
        %498 = vmatprep.subr.mxu0 0.0
        %499 = vmatpush2.msra.mxu0 0.0
        %500 = vmatprep.subr.mxu0 0.0
        %501 = vmatpush2.msra.mxu0 0.0
        %502 = vmatprep.subr.mxu0 0.0
        %503 = vmatpush2.msra.mxu0 0.0
        %504 = vmatprep.subr.mxu0 0.0
        %505 = vmatpush2.msra.mxu0 0.0
        %506 = vmatprep.mubr.f32.mxu0 0.0
        %507 = vmatmul.mubr.f32.gmra.mxu0 %v440
        %v508 = vpop.f32.mrf.mxu0
        %v509 = vadd.f32 %v437, %v508
        %v510 = vpop.f32.mrf.mxu0
        %511 = vdwg.mxu0
        %512 = vst [vmem:[%s331] sm:$0xf] %v509
        %s513 = scalar_lea.vmem [#allocation2], 8
        %v514 = vld [vmem:[%s513] sm:$0xff]
        %515 = vmatprep.subr.mxu0 0.0
        %516 = vmatpush1.msra.mxu0 0.0
        %517 = vmatprep.subr.mxu0 0.0
        %518 = vmatpush1.msra.mxu0 0.0
        %519 = vmatprep.subr.mxu0 0.0
        %520 = vmatpush1.msra.mxu0 0.0
        %521 = vmatprep.subr.mxu0 0.0
        %522 = vmatpush1.msra.mxu0 0.0
        %523 = vmatprep.subr.mxu0 0.0
        %524 = vmatpush1.msra.mxu0 0.0
        %525 = vmatprep.subr.mxu0 0.0
        %526 = vmatpush1.msra.mxu0 0.0
        %527 = vmatprep.subr.mxu0 0.0
        %528 = vmatpush1.msra.mxu0 0.0
        %529 = vmatprep.subr.mxu0 0.0
        %530 = vmatpush1.msra.mxu0 0.0
        %531 = vmatprep.subr.mxu0 0.0
        %532 = vmatpush1.msra.mxu0 0.0
        %533 = vmatprep.subr.mxu0 0.0
        %534 = vmatpush1.msra.mxu0 0.0
        %535 = vmatprep.subr.mxu0 0.0
        %536 = vmatpush1.msra.mxu0 0.0
        %537 = vmatprep.subr.mxu0 0.0
        %538 = vmatpush1.msra.mxu0 0.0
        %539 = vmatprep.subr.mxu0 0.0
        %540 = vmatpush1.msra.mxu0 0.0
        %541 = vmatprep.subr.mxu0 0.0
        %542 = vmatpush1.msra.mxu0 0.0
        %543 = vmatprep.subr.mxu0 0.0
        %544 = vmatpush1.msra.mxu0 0.0
        %545 = vmatprep.subr.mxu0 0.0
        %546 = vmatpush1.msra.mxu0 %v514
        %547 = vmatprep.subr.mxu0 0.0
        %548 = vmatpush2.msra.mxu0 0.0
        %549 = vmatprep.subr.mxu0 0.0
        %550 = vmatpush2.msra.mxu0 0.0
        %551 = vmatprep.subr.mxu0 0.0
        %552 = vmatpush2.msra.mxu0 0.0
        %553 = vmatprep.subr.mxu0 0.0
        %554 = vmatpush2.msra.mxu0 0.0
        %555 = vmatprep.subr.mxu0 0.0
        %556 = vmatpush2.msra.mxu0 0.0
        %557 = vmatprep.subr.mxu0 0.0
        %558 = vmatpush2.msra.mxu0 0.0
        %559 = vmatprep.subr.mxu0 0.0
        %560 = vmatpush2.msra.mxu0 0.0
        %561 = vmatprep.subr.mxu0 0.0
        %562 = vmatpush2.msra.mxu0 0.0
        %563 = vmatprep.subr.mxu0 0.0
        %564 = vmatpush2.msra.mxu0 0.0
        %565 = vmatprep.subr.mxu0 0.0
        %566 = vmatpush2.msra.mxu0 0.0
        %567 = vmatprep.subr.mxu0 0.0
        %568 = vmatpush2.msra.mxu0 0.0
        %569 = vmatprep.subr.mxu0 0.0
        %570 = vmatpush2.msra.mxu0 0.0
        %571 = vmatprep.subr.mxu0 0.0
        %572 = vmatpush2.msra.mxu0 0.0
        %573 = vmatprep.subr.mxu0 0.0
        %574 = vmatpush2.msra.mxu0 0.0
        %575 = vmatprep.subr.mxu0 0.0
        %576 = vmatpush2.msra.mxu0 0.0
        %577 = vmatprep.subr.mxu0 0.0
        %578 = vmatpush2.msra.mxu0 0.0
        %579 = vmatprep.mubr.f32.mxu0 0.0
        %580 = vmatmul.mubr.f32.gmra.mxu0 %v355
        %v581 = vpop.f32.mrf.mxu0
        %v582 = vadd.f32 %v351, %v581
        %v583 = vpop.f32.mrf.mxu0
        %584 = vdwg.mxu0
        %v585 = vxor.u32 %v582, 2147483648
        %v586 = vmul.f32 %v585, 1.442695
        %v587 = vpow.pop %v586
        %v588 = vadd.f32 %v587, 1.0
        %v589 = vrcp.pop %v588
        %v590 = vmul.f32 1.0, %v589
        %v591 = vmul.f32 %v514, %v590
        %592 = vmatprep.subr.mxu0 0.0
        %593 = vmatpush1.msra.mxu0 0.0
        %594 = vmatprep.subr.mxu0 0.0
        %595 = vmatpush1.msra.mxu0 0.0
        %596 = vmatprep.subr.mxu0 0.0
        %597 = vmatpush1.msra.mxu0 0.0
        %598 = vmatprep.subr.mxu0 0.0
        %599 = vmatpush1.msra.mxu0 0.0
        %600 = vmatprep.subr.mxu0 0.0
        %601 = vmatpush1.msra.mxu0 0.0
        %602 = vmatprep.subr.mxu0 0.0
        %603 = vmatpush1.msra.mxu0 0.0
        %604 = vmatprep.subr.mxu0 0.0
        %605 = vmatpush1.msra.mxu0 0.0
        %606 = vmatprep.subr.mxu0 0.0
        %607 = vmatpush1.msra.mxu0 0.0
        %608 = vmatprep.subr.mxu0 0.0
        %609 = vmatpush1.msra.mxu0 0.0
        %610 = vmatprep.subr.mxu0 0.0
        %611 = vmatpush1.msra.mxu0 0.0
        %612 = vmatprep.subr.mxu0 0.0
        %613 = vmatpush1.msra.mxu0 0.0
        %614 = vmatprep.subr.mxu0 0.0
        %615 = vmatpush1.msra.mxu0 0.0
        %616 = vmatprep.subr.mxu0 0.0
        %617 = vmatpush1.msra.mxu0 0.0
        %618 = vmatprep.subr.mxu0 0.0
        %619 = vmatpush1.msra.mxu0 0.0
        %620 = vmatprep.subr.mxu0 0.0
        %621 = vmatpush1.msra.mxu0 0.0
        %622 = vmatprep.subr.mxu0 0.0
        %623 = vmatpush1.msra.mxu0 %v591
        %624 = vmatprep.subr.mxu0 0.0
        %625 = vmatpush2.msra.mxu0 0.0
        %626 = vmatprep.subr.mxu0 0.0
        %627 = vmatpush2.msra.mxu0 0.0
        %628 = vmatprep.subr.mxu0 0.0
        %629 = vmatpush2.msra.mxu0 0.0
        %630 = vmatprep.subr.mxu0 0.0
        %631 = vmatpush2.msra.mxu0 0.0
        %632 = vmatprep.subr.mxu0 0.0
        %633 = vmatpush2.msra.mxu0 0.0
        %634 = vmatprep.subr.mxu0 0.0
        %635 = vmatpush2.msra.mxu0 0.0
        %636 = vmatprep.subr.mxu0 0.0
        %637 = vmatpush2.msra.mxu0 0.0
        %638 = vmatprep.subr.mxu0 0.0
        %639 = vmatpush2.msra.mxu0 0.0
        %640 = vmatprep.subr.mxu0 0.0
        %641 = vmatpush2.msra.mxu0 0.0
        %642 = vmatprep.subr.mxu0 0.0
        %643 = vmatpush2.msra.mxu0 0.0
        %644 = vmatprep.subr.mxu0 0.0
        %645 = vmatpush2.msra.mxu0 0.0
        %646 = vmatprep.subr.mxu0 0.0
        %647 = vmatpush2.msra.mxu0 0.0
        %648 = vmatprep.subr.mxu0 0.0
        %649 = vmatpush2.msra.mxu0 0.0
        %650 = vmatprep.subr.mxu0 0.0
        %651 = vmatpush2.msra.mxu0 0.0
        %652 = vmatprep.subr.mxu0 0.0
        %653 = vmatpush2.msra.mxu0 0.0
        %654 = vmatprep.subr.mxu0 0.0
        %655 = vmatpush2.msra.mxu0 0.0
        %656 = vmatprep.mubr.f32.mxu0 0.0
        %657 = vmatmul.mubr.f32.gmra.mxu0 %v440
        %v658 = vpop.f32.mrf.mxu0
        %v659 = vadd.f32 %v437, %v658
        %v660 = vpop.f32.mrf.mxu0
        %661 = vdwg.mxu0
        %s662 = scalar_lea.vmem %s331, 4 [#allocation8]
        %663 = vst [vmem:[%s662] sm:$0xf] %v659
        %s664 = sand.u32 %s188, 1
        %s665 = scalar_lea.sflag [#allocation5], %s664
        %s666 = sand.u32 %s188, 1
        %s667 = smul.addr %s666, 8
        %s668 = scalar_lea.vmem [#allocation8], %s667
        // Predicated region
        $region53: #{tpu_custom_call.1} parent=43 // pred_check
          %p669 = pneg %p198
        $region54: #{tpu_custom_call.1} parent=43 // pred_check_branch
          %671 = sbr.rel (%p669) target = $region56
        $region55: #{tpu_custom_call.1} parent=43 // pred_region
          %s672 = smul.u32 2, %s30
          %s674 = ssub.s32 128, 128
          %675 = vsyncadd %s665, %s674
          %s676 = smul.addr %s672, 2
          %s677 = sadd.s32 %s31, %s676
          %s678 = smul.addr %s677, 64
          %s679 = scalar_lea.hbm %s6, %s678
          %s680 = sshll.u32 %s668, 4
          %s681 = int_to_ptr.vmem [resolvable:$true] %s680
          %686 = dma.vmem_to_hbm [thread:$0]  %s681, 128, %s679, %s665, 64, 128, 4
        $region56: #{tpu_custom_call.1} parent=43 // pred_fallthru
          _
      $region44: #{tpu_custom_call.1} parent=5 // pred_fallthru
        _
      %p687 = scmp.le.s32.totalorder 2, %s21
      // Predicated region
      $region57: #{tpu_custom_call.1} parent=5 // pred_check
        %p688 = pneg %p687
      $region58: #{tpu_custom_call.1} parent=5 // pred_check_branch
        %690 = sbr.rel (%p688) target = $region60
      $region59: #{tpu_custom_call.1} parent=5 // pred_region
        %s691 = ssub.s32 %s21, 2
        // Predicated region
        $region61: #{tpu_custom_call.1} parent=59 // pred_check
          %p692 = pneg %p204
        $region62: #{tpu_custom_call.1} parent=59 // pred_check_branch
          %694 = sbr.rel (%p692) target = $region64
        $region63: #{tpu_custom_call.1} parent=59 // pred_region
          %s695 = sand.u32 %s189, 1
          %s696 = scalar_lea.sflag [#allocation5], %s695
          %s697 = sand.u32 %s189, 1
          %s698 = smul.addr %s697, 8
          %s699 = scalar_lea.vmem [#allocation8], %s698
          %700 = dma.done %s696, 128
        $region64: #{tpu_custom_call.1} parent=59 // pred_fallthru
          _
      $region60: #{tpu_custom_call.1} parent=5 // pred_fallthru
        _
    $region6: #{tpu_custom_call.1} parent=1 // loop_footer
      %s25 = sadd.s32 1, %s21
    $region7: #{tpu_custom_call.1} parent=1 // loop_footer_branch
      %20 = sbr.rel target = $region3
    $region8: #{tpu_custom_call.1} parent=1 // loop_exit
      _
    %701 = vsyncpa [#allocation4], 1
    %s702 = scalar_lea.sflag [#allocation4], 1
    %703 = vsyncpa %s702, 1
    %704 = vsyncpa [#allocation7], 1
    %s705 = scalar_lea.sflag [#allocation7], 1
    %706 = vsyncpa %s705, 1
    %707 = vsyncpa [#allocation5], 1
    %s708 = scalar_lea.sflag [#allocation5], 1
    %709 = vsyncpa %s708, 1

</llo_original>
